<compile_context>
chip_gen: v7x
topology: tpu7x:2x2x1
jax: 0.10.0
libtpu: 0.0.40
codegen_flags: <defaults>
</compile_context>

<pallas_src>
import jax
import jax.numpy as jnp
from jax.experimental import pallas as pl
from jax.experimental.pallas import tpu as pltpu


def local_op_kernel(x_ref, w1_ref, w2_ref, b1_ref, b2_ref, o_ref):
    # x_ref: (G*s, d); rows are (group, point) pairs, group-major.
    x = x_ref[...]
    # conv1 (1x1, no bias) with BN1 scale folded into the weight: X @ (s1 * W1)^T
    y1 = jnp.dot(x, w1_ref[...], preferred_element_type=jnp.float32)    # (G*s, C)
    y1 = jnp.maximum(y1 + b1_ref[...], 0.0)
    # conv2 (1x1, no bias) with BN2 scale folded: Y1 @ (s2 * W2)^T
    y2 = jnp.dot(y1, w2_ref[...], preferred_element_type=jnp.float32)   # (G*s, C)
    y2 = jnp.maximum(y2 + b2_ref[...], 0.0)
    # segmented max over the s points of each group
    g = o_ref.shape[0]
    s = x_ref.shape[0] // g
    o_ref[...] = jnp.max(y2.reshape(g, s, y2.shape[-1]), axis=1)        # (G, C)


def _pick_chunk(BN, s, d, C, budget_bytes=16 * 1024 * 1024):
    """Largest group-chunk G that keeps the per-step VMEM footprint in budget.

    Per group (f32): double-buffered input (2*s*d) + two (s, C) intermediates
    + double-buffered (1, C) output row.  Falls back to a single full-size
    step if no tile-aligned divisor fits.
    """
    per_group = 4 * (2 * s * d + 2 * s * C + 2 * C)
    g_max = max(1, budget_bytes // per_group)
    if BN <= g_max:
        return BN
    best = BN  # fallback: one big step (correct, possibly spill-bound)
    for g in range(1, BN + 1):
        # keep (8,128)-tile alignment: out block (G, C) and in block (G*s, d)
        if BN % g == 0 and g <= g_max and g % 8 == 0:
            best = g
    return best


def local_op(x, w1, w2, scale1, bias1, scale2, bias2):
    """x: (b, n, s, d) float32.  Returns (b, C, n) float32."""
    b, n, s, d = x.shape
    C = w1.shape[0]
    BN = b * n

    # Fold BN scale into the conv weights (s*(W@f)+b == (s*W)@f+b) and transpose
    # so the kernel computes X @ W^T.  Tiny one-time XLA ops.
    w1t = (w1 * scale1.reshape(C, 1)).T          # (d, C)
    w2t = (w2 * scale2.reshape(C, 1)).T          # (C, C)
    b1 = bias1.reshape(1, C)
    b2 = bias2.reshape(1, C)

    # Contiguous flatten (no HBM transpose): row r = g*s + j holds x[b_i, n_i, j, :].
    x_flat = x.reshape(BN * s, d)

    G = _pick_chunk(BN, s, d, C)
    grid = (BN // G,)

    out = pl.pallas_call(
        local_op_kernel,
        out_shape=jax.ShapeDtypeStruct((BN, C), jnp.float32),
        grid=grid,
        in_specs=[
            pl.BlockSpec((G * s, d), lambda i: (i, 0)),    # chunk of flattened x
            pl.BlockSpec((d, C), lambda i: (0, 0)),        # folded W1^T (resident)
            pl.BlockSpec((C, C), lambda i: (0, 0)),        # folded W2^T (resident)
            pl.BlockSpec((1, C), lambda i: (0, 0)),        # bn1 bias (resident)
            pl.BlockSpec((1, C), lambda i: (0, 0)),        # bn2 bias (resident)
        ],
        out_specs=pl.BlockSpec((G, C), lambda i: (i, 0)),  # streamed per chunk
        compiler_params=pltpu.CompilerParams(
            dimension_semantics=("parallel",),
            vmem_limit_bytes=64 * 1024 * 1024,
        ),
    )(x_flat, w1t, w2t, b1, b2)

    # (b*n, C) -> (b, n, C) -> (b, C, n)   (tiny XLA transpose on the output)
    return jnp.transpose(out.reshape(b, n, C), (0, 2, 1))


def _fold_bn(gamma, beta, mean, var, eps=1e-5):
    scale = gamma / jnp.sqrt(var + eps)
    bias = beta - mean * scale
    return scale, bias


def _reference(x, w1, w2, s1, b1, s2, b2):
    b, n, s, d = x.shape
    x_k = jnp.transpose(x, (0, 1, 3, 2)).reshape(b * n, d, s)
    y1 = jnp.maximum(jnp.einsum("cd,gds->gcs", w1, x_k) * s1[None, :, None]
                     + b1[None, :, None], 0.0)
    y2 = jnp.maximum(jnp.einsum("ce,ges->gcs", w2, y1) * s2[None, :, None]
                     + b2[None, :, None], 0.0)
    y = jnp.max(y2, axis=2)                                  # (b*n, C)
    return jnp.transpose(y.reshape(b, n, -1), (0, 2, 1))


if __name__ == "__main__":
    # small shapes: b=2, n=8, s=16, d(in_channels)=32, out_channels=64
    b, n, s, d, C = 2, 8, 16, 32, 64

    key = jax.random.PRNGKey(0)
    kx, kw1, kw2, kg1, kb1, km1, kv1, kg2, kb2, km2, kv2 = jax.random.split(key, 11)

    x = jax.random.normal(kx, (b, n, s, d), dtype=jnp.float32)

    # deterministic parameter init (shapes from Conv1d/BatchNorm1d in __init__)
    w1 = jax.random.normal(kw1, (C, d), dtype=jnp.float32) * 0.1   # conv1.weight (k=1)
    w2 = jax.random.normal(kw2, (C, C), dtype=jnp.float32) * 0.1   # conv2.weight (k=1)

    gamma1 = 1.0 + 0.1 * jax.random.normal(kg1, (C,), dtype=jnp.float32)
    beta1 = 0.1 * jax.random.normal(kb1, (C,), dtype=jnp.float32)
    mean1 = 0.1 * jax.random.normal(km1, (C,), dtype=jnp.float32)
    var1 = jax.random.uniform(kv1, (C,), minval=0.5, maxval=1.5, dtype=jnp.float32)

    gamma2 = 1.0 + 0.1 * jax.random.normal(kg2, (C,), dtype=jnp.float32)
    beta2 = 0.1 * jax.random.normal(kb2, (C,), dtype=jnp.float32)
    mean2 = 0.1 * jax.random.normal(km2, (C,), dtype=jnp.float32)
    var2 = jax.random.uniform(kv2, (C,), minval=0.5, maxval=1.5, dtype=jnp.float32)

    s1, b1 = _fold_bn(gamma1, beta1, mean1, var1)
    s2, b2 = _fold_bn(gamma2, beta2, mean2, var2)

    out = local_op(x, w1, w2, s1, b1, s2, b2)
    out = jax.block_until_ready(out)

    ref = _reference(x, w1, w2, s1, b1, s2, b2)
    assert out.shape == (b, C, n), out.shape
    assert jnp.allclose(out, ref, atol=1e-4, rtol=1e-4), "mismatch vs JAX reference"

    print("KERNEL_OK")
</pallas_src>

<mosaic_0001>
module attributes {stable_mosaic.version = 11 : i64} {
  func.func @local_op_kernel(%arg0: i32, %arg1: memref<256x32xf32, #tpu.memory_space<vmem>>, %arg2: memref<32x64xf32, #tpu.memory_space<vmem>>, %arg3: memref<64x64xf32, #tpu.memory_space<vmem>>, %arg4: memref<1x64xf32, #tpu.memory_space<vmem>>, %arg5: memref<1x64xf32, #tpu.memory_space<vmem>>, %arg6: memref<16x64xf32, #tpu.memory_space<vmem>>) attributes {dimension_semantics = [#tpu.dimension_semantics<parallel>], iteration_bounds = array<i64: 1>, scalar_prefetch = 0 : i64, scratch_operands = 0 : i64, tpu.core_type = #tpu.core_type<tc>, window_params = [{transform_indices = @transform_0, window_bounds = array<i64: 256, 32>}, {pipeline_mode = #tpu.pipeline_mode<synchronous>, transform_indices = @transform_1, window_bounds = array<i64: 32, 64>}, {pipeline_mode = #tpu.pipeline_mode<synchronous>, transform_indices = @transform_2, window_bounds = array<i64: 64, 64>}, {pipeline_mode = #tpu.pipeline_mode<synchronous>, transform_indices = @transform_3, window_bounds = array<i64: 1, 64>}, {pipeline_mode = #tpu.pipeline_mode<synchronous>, transform_indices = @transform_4, window_bounds = array<i64: 1, 64>}, {transform_indices = @transform_5, window_bounds = array<i64: 16, 64>}]} {
    %c0 = arith.constant 0 : index
    %c0_0 = arith.constant 0 : index
    %0 = vector.load %arg1[%c0, %c0_0] : memref<256x32xf32, #tpu.memory_space<vmem>>, vector<256x32xf32>
    %c0_1 = arith.constant 0 : index
    %c0_2 = arith.constant 0 : index
    %1 = vector.load %arg2[%c0_1, %c0_2] : memref<32x64xf32, #tpu.memory_space<vmem>>, vector<32x64xf32>
    %cst = arith.constant dense<0.000000e+00> : vector<256x64xf32>
    %2 = tpu.matmul %0, %1, %cst {dimension_numbers = #tpu.dot_dimension_numbers<[1], [0], [0], [1], [0, 0, 1, 1], [], []>} : vector<256x32xf32>, vector<32x64xf32>, vector<256x64xf32> -> vector<256x64xf32>
    %c0_3 = arith.constant 0 : index
    %c0_4 = arith.constant 0 : index
    %3 = vector.load %arg4[%c0_3, %c0_4] : memref<1x64xf32, #tpu.memory_space<vmem>>, vector<1x64xf32>
    %4 = vector.broadcast %3 : vector<1x64xf32> to vector<256x64xf32>
    %5 = arith.addf %2, %4 : vector<256x64xf32>
    %cst_5 = arith.constant 0.000000e+00 : f32
    %6 = vector.broadcast %cst_5 : f32 to vector<256x64xf32>
    %7 = arith.maximumf %5, %6 : vector<256x64xf32>
    %c0_6 = arith.constant 0 : index
    %c0_7 = arith.constant 0 : index
    %8 = vector.load %arg3[%c0_6, %c0_7] : memref<64x64xf32, #tpu.memory_space<vmem>>, vector<64x64xf32>
    %cst_8 = arith.constant dense<0.000000e+00> : vector<256x64xf32>
    %9 = tpu.matmul %7, %8, %cst_8 {dimension_numbers = #tpu.dot_dimension_numbers<[1], [0], [0], [1], [0, 0, 1, 1], [], []>} : vector<256x64xf32>, vector<64x64xf32>, vector<256x64xf32> -> vector<256x64xf32>
    %c0_9 = arith.constant 0 : index
    %c0_10 = arith.constant 0 : index
    %10 = vector.load %arg5[%c0_9, %c0_10] : memref<1x64xf32, #tpu.memory_space<vmem>>, vector<1x64xf32>
    %11 = vector.broadcast %10 : vector<1x64xf32> to vector<256x64xf32>
    %12 = arith.addf %9, %11 : vector<256x64xf32>
    %cst_11 = arith.constant 0.000000e+00 : f32
    %13 = vector.broadcast %cst_11 : f32 to vector<256x64xf32>
    %14 = arith.maximumf %12, %13 : vector<256x64xf32>
    %15 = vector.shape_cast %14 : vector<256x64xf32> to vector<16x16x64xf32>
    %cst_12 = arith.constant dense<0xFF800000> : vector<16x64xf32>
    %16 = vector.multi_reduction <maximumf>, %15, %cst_12 [1] : vector<16x16x64xf32> to vector<16x64xf32>
    %c0_13 = arith.constant 0 : index
    %c0_14 = arith.constant 0 : index
    %17 = vector.load %arg6[%c0_13, %c0_14] : memref<16x64xf32, #tpu.memory_space<vmem>>, vector<16x64xf32>
    tpu.vector_store %arg6[%c0_13, %c0_14], %16 {strides = array<i32>} : memref<16x64xf32, #tpu.memory_space<vmem>>, vector<16x64xf32>,
    return
  }
  func.func @transform_0(%arg0: i32) -> (i32, i32) {
    %c0_i32 = arith.constant 0 : i32
    %c0_i32_0 = arith.constant 0 : i32
    return %arg0, %c0_i32 : i32, i32
  }
  func.func @transform_1(%arg0: i32) -> (i32, i32) {
    %c0_i32 = arith.constant 0 : i32
    %c0_i32_0 = arith.constant 0 : i32
    %c0_i32_1 = arith.constant 0 : i32
    return %c0_i32, %c0_i32_0 : i32, i32
  }
  func.func @transform_2(%arg0: i32) -> (i32, i32) {
    %c0_i32 = arith.constant 0 : i32
    %c0_i32_0 = arith.constant 0 : i32
    %c0_i32_1 = arith.constant 0 : i32
    return %c0_i32, %c0_i32_0 : i32, i32
  }
  func.func @transform_3(%arg0: i32) -> (i32, i32) {
    %c0_i32 = arith.constant 0 : i32
    %c0_i32_0 = arith.constant 0 : i32
    %c0_i32_1 = arith.constant 0 : i32
    return %c0_i32, %c0_i32_0 : i32, i32
  }
  func.func @transform_4(%arg0: i32) -> (i32, i32) {
    %c0_i32 = arith.constant 0 : i32
    %c0_i32_0 = arith.constant 0 : i32
    %c0_i32_1 = arith.constant 0 : i32
    return %c0_i32, %c0_i32_0 : i32, i32
  }
  func.func @transform_5(%arg0: i32) -> (i32, i32) {
    %c0_i32 = arith.constant 0 : i32
    %c0_i32_0 = arith.constant 0 : i32
    return %arg0, %c0_i32 : i32, i32
  }
}

</mosaic_0001>

<llo_original>
// kernel: tpu_custom_call.1
$region0: #{tpu_custom_call.1}
  #allocation0 [shape = 'u32[]', space=smem, size = 0x4, offset = 0x4, fixed_abs, tag = 'smem constant byte address 0x4 - core index']
  #allocation1 [shape = 'u32[144,128]{1,0:T(1,128)}', space=vmem, size = 0x12000, scoped, tag = 'internal scratch']
  %s0 = inlined_call_operand.hbm [shape: f32[256,32], index: 0, kind: input, shape index: {}]
  %s1 = inlined_call_operand.hbm [shape: f32[32,64], index: 1, kind: input, shape index: {}]
  %s2 = inlined_call_operand.hbm [shape: f32[64,64], index: 2, kind: input, shape index: {}]
  %s3 = inlined_call_operand.hbm [shape: f32[1,64], index: 3, kind: input, shape index: {}]
  %s4 = inlined_call_operand.hbm [shape: f32[1,64], index: 4, kind: input, shape index: {}]
  %s5 = inlined_call_operand.hbm [shape: f32[16,64], index: 5, kind: output, shape index: {}]
  %s6 = sld [smem:[#allocation0]]
  $region50: #{tpu_custom_call.1} parent=0
    _
  %s8 = ssub.s32 1, %s6
  %s9 = scalar_select 0, %s8, %s6
  $region1: #{tpu_custom_call.1} parent=0
    #allocation2 [shape = 'u8[131072]{0}', space=vmem, size = 0x20000, scoped, tag = 'input window, operand 0, single buffered']
    #allocation3 [shape = 's32[1]{0}', space=sflag, size = 0x4, scoped, tag = 'scoped memory for tpu_custom_call.1']
    #allocation4 [shape = 's32[1]{0}', space=sflag, size = 0x4, scoped, tag = 'scoped memory for tpu_custom_call.1']
    #allocation5 [shape = 'u8[16384]{0}', space=vmem, size = 0x4000, scoped, tag = 'input window, operand 1, single buffered']
    #allocation6 [shape = 's32[1]{0}', space=sflag, size = 0x4, scoped, tag = 'scoped memory for tpu_custom_call.1']
    #allocation7 [shape = 'u8[32768]{0}', space=vmem, size = 0x8000, scoped, tag = 'input window, operand 2, single buffered']
    #allocation8 [shape = 'u8[512]{0}', space=vmem, size = 0x400, scoped, tag = 'input window, operand 3, single buffered']
    #allocation9 [shape = 's32[1]{0}', space=sflag, size = 0x4, scoped, tag = 'scoped memory for tpu_custom_call.1']
    #allocation10 [shape = 'u8[512]{0}', space=vmem, size = 0x400, scoped, tag = 'input window, operand 4, single buffered']
    #allocation11 [shape = 'u8[8192]{0}', space=vmem, size = 0x2000, scoped, tag = 'output window, operand 0, single buffered']
    %10 = vsyncpa [#allocation3], 0
    %11 = vsyncpa [#allocation6], 0
    %12 = vsyncpa [#allocation9], 0
    %13 = vsyncpa [#allocation4], 0
    // Predicated region
    $region2: #{tpu_custom_call.1} parent=1 // pred_check
      _
    $region3: #{tpu_custom_call.1} parent=1 // pred_check_branch
      %15 = sbr.rel (0) target = $region5
    $region4: #{tpu_custom_call.1} parent=1 // pred_region
      %s17 = ssub.s32 4096, 4096
      %18 = vsyncadd [#allocation3], %s17
      %s19 = sshll.u32 [#allocation2], 4
      %s20 = int_to_ptr.vmem [resolvable:$true] %s19
      %25 = dma.hbm_to_vmem [thread:$0]  %s0, 4096, %s20, [#allocation3], 128, 128, 8
    $region5: #{tpu_custom_call.1} parent=1 // pred_fallthru
      _
    // Predicated region
    $region6: #{tpu_custom_call.1} parent=1 // pred_check
      _
    $region7: #{tpu_custom_call.1} parent=1 // pred_check_branch
      %27 = sbr.rel (0) target = $region9
    $region8: #{tpu_custom_call.1} parent=1 // pred_region
      %s29 = ssub.s32 512, 512
      %30 = vsyncadd [#allocation6], %s29
      %s31 = sshll.u32 [#allocation5], 4
      %s32 = int_to_ptr.vmem [resolvable:$true] %s31
      %37 = dma.hbm_to_vmem [thread:$0]  %s1, 512, %s32, [#allocation6], 128, 128, 8
    $region9: #{tpu_custom_call.1} parent=1 // pred_fallthru
      _
    // Predicated region
    $region10: #{tpu_custom_call.1} parent=1 // pred_check
      _
    $region11: #{tpu_custom_call.1} parent=1 // pred_check_branch
      %39 = sbr.rel (0) target = $region13
    $region12: #{tpu_custom_call.1} parent=1 // pred_region
      %s41 = ssub.s32 1024, 1024
      %42 = vsyncadd [#allocation6], %s41
      %s43 = sshll.u32 [#allocation7], 4
      %s44 = int_to_ptr.vmem [resolvable:$true] %s43
      %49 = dma.hbm_to_vmem [thread:$0]  %s2, 1024, %s44, [#allocation6], 128, 128, 8
    $region13: #{tpu_custom_call.1} parent=1 // pred_fallthru
      _
    // Predicated region
    $region14: #{tpu_custom_call.1} parent=1 // pred_check
      _
    $region15: #{tpu_custom_call.1} parent=1 // pred_check_branch
      %51 = sbr.rel (0) target = $region17
    $region16: #{tpu_custom_call.1} parent=1 // pred_region
      %s53 = ssub.s32 16, 16
      %54 = vsyncadd [#allocation9], %s53
      %s56 = sshll.u32 [#allocation8], 4
      %s57 = int_to_ptr.vmem [resolvable:$true] %s56
      %59 = dma.hbm_to_vmem [thread:$0]  %s3, 16, %s57, [#allocation9]
    $region17: #{tpu_custom_call.1} parent=1 // pred_fallthru
      _
    // Predicated region
    $region18: #{tpu_custom_call.1} parent=1 // pred_check
      _
    $region19: #{tpu_custom_call.1} parent=1 // pred_check_branch
      %61 = sbr.rel (0) target = $region21
    $region20: #{tpu_custom_call.1} parent=1 // pred_region
      %s63 = ssub.s32 16, 16
      %64 = vsyncadd [#allocation9], %s63
      %s66 = sshll.u32 [#allocation10], 4
      %s67 = int_to_ptr.vmem [resolvable:$true] %s66
      %69 = dma.hbm_to_vmem [thread:$0]  %s4, 16, %s67, [#allocation9]
    $region21: #{tpu_custom_call.1} parent=1 // pred_fallthru
      _
    // Predicated region
    $region22: #{tpu_custom_call.1} parent=1 // pred_check
      _
    $region23: #{tpu_custom_call.1} parent=1 // pred_check_branch
      %71 = sbr.rel (0) target = $region25
    $region24: #{tpu_custom_call.1} parent=1 // pred_region
      %72 = dma.done [#allocation3], 4096
    $region25: #{tpu_custom_call.1} parent=1 // pred_fallthru
      _
    // Predicated region
    $region26: #{tpu_custom_call.1} parent=1 // pred_check
      _
    $region27: #{tpu_custom_call.1} parent=1 // pred_check_branch
      %74 = sbr.rel (0) target = $region29
    $region28: #{tpu_custom_call.1} parent=1 // pred_region
      %75 = dma.done [#allocation6], 512
    $region29: #{tpu_custom_call.1} parent=1 // pred_fallthru
      _
    // Predicated region
    $region30: #{tpu_custom_call.1} parent=1 // pred_check
      _
    $region31: #{tpu_custom_call.1} parent=1 // pred_check_branch
      %77 = sbr.rel (0) target = $region33
    $region32: #{tpu_custom_call.1} parent=1 // pred_region
      %78 = dma.done [#allocation6], 1024
    $region33: #{tpu_custom_call.1} parent=1 // pred_fallthru
      _
    // Predicated region
    $region34: #{tpu_custom_call.1} parent=1 // pred_check
      _
    $region35: #{tpu_custom_call.1} parent=1 // pred_check_branch
      %80 = sbr.rel (0) target = $region37
    $region36: #{tpu_custom_call.1} parent=1 // pred_region
      %81 = dma.done [#allocation9], 16
    $region37: #{tpu_custom_call.1} parent=1 // pred_fallthru
      _
    // Predicated region
    $region38: #{tpu_custom_call.1} parent=1 // pred_check
      _
    $region39: #{tpu_custom_call.1} parent=1 // pred_check_branch
      %83 = sbr.rel (0) target = $region41
    $region40: #{tpu_custom_call.1} parent=1 // pred_region
      %84 = dma.done [#allocation9], 16
    $region41: #{tpu_custom_call.1} parent=1 // pred_fallthru
      _
    %v85 = vld [vmem:[#allocation2] sm:$0xff]
    %v86 = vld [vmem:[#allocation2 + $0x8] sm:$0xff]
    %v87 = vld [vmem:[#allocation2 + $0x10] sm:$0xff]
    %v88 = vld [vmem:[#allocation2 + $0x18] sm:$0xff]
    %v89 = vld [vmem:[#allocation2 + $0x20] sm:$0xff]
    %v90 = vld [vmem:[#allocation2 + $0x28] sm:$0xff]
    %v91 = vld [vmem:[#allocation2 + $0x30] sm:$0xff]
    %v92 = vld [vmem:[#allocation2 + $0x38] sm:$0xff]
    %v93 = vld [vmem:[#allocation2 + $0x40] sm:$0xff]
    %v94 = vld [vmem:[#allocation2 + $0x48] sm:$0xff]
    %v95 = vld [vmem:[#allocation2 + $0x50] sm:$0xff]
    %v96 = vld [vmem:[#allocation2 + $0x58] sm:$0xff]
    %v97 = vld [vmem:[#allocation2 + $0x60] sm:$0xff]
    %v98 = vld [vmem:[#allocation2 + $0x68] sm:$0xff]
    %v99 = vld [vmem:[#allocation2 + $0x70] sm:$0xff]
    %v100 = vld [vmem:[#allocation2 + $0x78] sm:$0xff]
    %v101 = vld [vmem:[#allocation2 + $0x80] sm:$0xff]
    %v102 = vld [vmem:[#allocation2 + $0x88] sm:$0xff]
    %v103 = vld [vmem:[#allocation2 + $0x90] sm:$0xff]
    %v104 = vld [vmem:[#allocation2 + $0x98] sm:$0xff]
    %v105 = vld [vmem:[#allocation2 + $0xa0] sm:$0xff]
    %v106 = vld [vmem:[#allocation2 + $0xa8] sm:$0xff]
    %v107 = vld [vmem:[#allocation2 + $0xb0] sm:$0xff]
    %v108 = vld [vmem:[#allocation2 + $0xb8] sm:$0xff]
    %v109 = vld [vmem:[#allocation2 + $0xc0] sm:$0xff]
    %v110 = vld [vmem:[#allocation2 + $0xc8] sm:$0xff]
    %v111 = vld [vmem:[#allocation2 + $0xd0] sm:$0xff]
    %v112 = vld [vmem:[#allocation2 + $0xd8] sm:$0xff]
    %v113 = vld [vmem:[#allocation2 + $0xe0] sm:$0xff]
    %v114 = vld [vmem:[#allocation2 + $0xe8] sm:$0xff]
    %v115 = vld [vmem:[#allocation2 + $0xf0] sm:$0xff]
    %v116 = vld [vmem:[#allocation2 + $0xf8] sm:$0xff]
    %v117 = vld [vmem:[#allocation5] sm:$0xff]
    %v118 = vld [vmem:[#allocation5 + $0x8] sm:$0xff]
    %v119 = vld [vmem:[#allocation5 + $0x10] sm:$0xff]
    %v120 = vld [vmem:[#allocation5 + $0x18] sm:$0xff]
    %v121 = vld [vmem:[#allocation8] sm:$0x1]
    %v123 = vlaneseq
    %v124 = vshrl.u32 %v123, 7
    %v125 = vsub.s32 0, %v124
    %v126 = vrot.slane %v121, %v125
    %vm128 = vcmask 261120
    %v130 = vsel %vm128, %v85, 0
    %v133 = vsel %vm128, %v86, 0
    %v136 = vsel %vm128, %v87, 0
    %v139 = vsel %vm128, %v88, 0
    %v142 = vsel %vm128, %v89, 0
    %v145 = vsel %vm128, %v90, 0
    %v148 = vsel %vm128, %v91, 0
    %v151 = vsel %vm128, %v92, 0
    %v154 = vsel %vm128, %v93, 0
    %v157 = vsel %vm128, %v94, 0
    %v160 = vsel %vm128, %v95, 0
    %v163 = vsel %vm128, %v96, 0
    %v166 = vsel %vm128, %v97, 0
    %v169 = vsel %vm128, %v98, 0
    %v172 = vsel %vm128, %v99, 0
    %v175 = vsel %vm128, %v100, 0
    %v178 = vsel %vm128, %v101, 0
    %v181 = vsel %vm128, %v102, 0
    %v184 = vsel %vm128, %v103, 0
    %v187 = vsel %vm128, %v104, 0
    %v190 = vsel %vm128, %v105, 0
    %v193 = vsel %vm128, %v106, 0
    %v196 = vsel %vm128, %v107, 0
    %v199 = vsel %vm128, %v108, 0
    %v202 = vsel %vm128, %v109, 0
    %v205 = vsel %vm128, %v110, 0
    %v208 = vsel %vm128, %v111, 0
    %v211 = vsel %vm128, %v112, 0
    %v214 = vsel %vm128, %v113, 0
    %v217 = vsel %vm128, %v114, 0
    %v220 = vsel %vm128, %v115, 0
    %v223 = vsel %vm128, %v116, 0
    %225 = vmatprep.subr.mxu0 0.0
    %226 = vmatpush1.msra.mxu0 %v117
    %227 = vmatprep.subr.mxu0 0.0
    %228 = vmatpush1.msra.mxu0 %v118
    %229 = vmatprep.subr.mxu0 0.0
    %230 = vmatpush1.msra.mxu0 %v119
    %231 = vmatprep.subr.mxu0 0.0
    %232 = vmatpush1.msra.mxu0 %v120
    %233 = vmatprep.subr.mxu0 0.0
    %234 = vmatpush1.msra.mxu0 0.0
    %235 = vmatprep.subr.mxu0 0.0
    %236 = vmatpush1.msra.mxu0 0.0
    %237 = vmatprep.subr.mxu0 0.0
    %238 = vmatpush1.msra.mxu0 0.0
    %239 = vmatprep.subr.mxu0 0.0
    %240 = vmatpush1.msra.mxu0 0.0
    %241 = vmatprep.subr.mxu0 0.0
    %242 = vmatpush1.msra.mxu0 0.0
    %243 = vmatprep.subr.mxu0 0.0
    %244 = vmatpush1.msra.mxu0 0.0
    %245 = vmatprep.subr.mxu0 0.0
    %246 = vmatpush1.msra.mxu0 0.0
    %247 = vmatprep.subr.mxu0 0.0
    %248 = vmatpush1.msra.mxu0 0.0
    %249 = vmatprep.subr.mxu0 0.0
    %250 = vmatpush1.msra.mxu0 0.0
    %251 = vmatprep.subr.mxu0 0.0
    %252 = vmatpush1.msra.mxu0 0.0
    %253 = vmatprep.subr.mxu0 0.0
    %254 = vmatpush1.msra.mxu0 0.0
    %255 = vmatprep.subr.mxu0 0.0
    %256 = vmatpush1.msra.mxu0 0.0
    %257 = vmatprep.subr.mxu0 0.0
    %258 = vmatpush1.msra.mxu0 0.0
    %259 = vmatprep.subr.mxu0 0.0
    %260 = vmatpush1.msra.mxu0 0.0
    %261 = vmatprep.subr.mxu0 0.0
    %262 = vmatpush1.msra.mxu0 0.0
    %263 = vmatprep.subr.mxu0 0.0
    %264 = vmatpush1.msra.mxu0 0.0
    %265 = vmatprep.subr.mxu0 0.0
    %266 = vmatpush1.msra.mxu0 0.0
    %267 = vmatprep.subr.mxu0 0.0
    %268 = vmatpush1.msra.mxu0 0.0
    %269 = vmatprep.subr.mxu0 0.0
    %270 = vmatpush1.msra.mxu0 0.0
    %271 = vmatprep.subr.mxu0 0.0
    %272 = vmatpush1.msra.mxu0 0.0
    %273 = vmatprep.subr.mxu0 0.0
    %274 = vmatpush1.msra.mxu0 0.0
    %275 = vmatprep.subr.mxu0 0.0
    %276 = vmatpush1.msra.mxu0 0.0
    %277 = vmatprep.subr.mxu0 0.0
    %278 = vmatpush1.msra.mxu0 0.0
    %279 = vmatprep.subr.mxu0 0.0
    %280 = vmatpush1.msra.mxu0 0.0
    %281 = vmatprep.subr.mxu0 0.0
    %282 = vmatpush1.msra.mxu0 0.0
    %283 = vmatprep.subr.mxu0 0.0
    %284 = vmatpush1.msra.mxu0 0.0
    %285 = vmatprep.subr.mxu0 0.0
    %286 = vmatpush1.msra.mxu0 0.0
    %287 = vmatprep.subr.mxu0 0.0
    %288 = vmatpush1.msra.mxu0 0.0
    %289 = vmatprep.mubr.f32.mxu0 0.0
    %290 = vmatmul.mubr.f32.gmra.mrb[0].mxu0 %v130
    %v291 = vpop.f32.mrb[0].mxu0
    %v292 = vadd.f32 %v126, %v291
    %v293 = vpop.f32.mrb[0].mxu0
    %294 = vmatprep.mubr.f32.mxu0 0.0
    %295 = vmatmul.mubr.f32.gmra.mrb[0].mxu0 %v133
    %v296 = vpop.f32.mrb[0].mxu0
    %v297 = vadd.f32 %v126, %v296
    %v298 = vpop.f32.mrb[0].mxu0
    %299 = vmatprep.mubr.f32.mxu0 0.0
    %300 = vmatmul.mubr.f32.gmra.mrb[0].mxu0 %v136
    %v301 = vpop.f32.mrb[0].mxu0
    %v302 = vadd.f32 %v126, %v301
    %v303 = vpop.f32.mrb[0].mxu0
    %304 = vmatprep.mubr.f32.mxu0 0.0
    %305 = vmatmul.mubr.f32.gmra.mrb[0].mxu0 %v139
    %v306 = vpop.f32.mrb[0].mxu0
    %v307 = vadd.f32 %v126, %v306
    %v308 = vpop.f32.mrb[0].mxu0
    %309 = vmatprep.mubr.f32.mxu0 0.0
    %310 = vmatmul.mubr.f32.gmra.mrb[0].mxu0 %v142
    %v311 = vpop.f32.mrb[0].mxu0
    %v312 = vadd.f32 %v126, %v311
    %v313 = vpop.f32.mrb[0].mxu0
    %314 = vmatprep.mubr.f32.mxu0 0.0
    %315 = vmatmul.mubr.f32.gmra.mrb[0].mxu0 %v145
    %v316 = vpop.f32.mrb[0].mxu0
    %v317 = vadd.f32 %v126, %v316
    %v318 = vpop.f32.mrb[0].mxu0
    %319 = vmatprep.mubr.f32.mxu0 0.0
    %320 = vmatmul.mubr.f32.gmra.mrb[0].mxu0 %v148
    %v321 = vpop.f32.mrb[0].mxu0
    %v322 = vadd.f32 %v126, %v321
    %v323 = vpop.f32.mrb[0].mxu0
    %324 = vmatprep.mubr.f32.mxu0 0.0
    %325 = vmatmul.mubr.f32.gmra.mrb[0].mxu0 %v151
    %v326 = vpop.f32.mrb[0].mxu0
    %v327 = vadd.f32 %v126, %v326
    %v328 = vpop.f32.mrb[0].mxu0
    %329 = vmatprep.mubr.f32.mxu0 0.0
    %330 = vmatmul.mubr.f32.gmra.mrb[0].mxu0 %v154
    %v331 = vpop.f32.mrb[0].mxu0
    %v332 = vadd.f32 %v126, %v331
    %v333 = vpop.f32.mrb[0].mxu0
    %334 = vmatprep.mubr.f32.mxu0 0.0
    %335 = vmatmul.mubr.f32.gmra.mrb[0].mxu0 %v157
    %v336 = vpop.f32.mrb[0].mxu0
    %v337 = vadd.f32 %v126, %v336
    %v338 = vpop.f32.mrb[0].mxu0
    %339 = vmatprep.mubr.f32.mxu0 0.0
    %340 = vmatmul.mubr.f32.gmra.mrb[0].mxu0 %v160
    %v341 = vpop.f32.mrb[0].mxu0
    %v342 = vadd.f32 %v126, %v341
    %v343 = vpop.f32.mrb[0].mxu0
    %344 = vmatprep.mubr.f32.mxu0 0.0
    %345 = vmatmul.mubr.f32.gmra.mrb[0].mxu0 %v163
    %v346 = vpop.f32.mrb[0].mxu0
    %v347 = vadd.f32 %v126, %v346
    %v348 = vpop.f32.mrb[0].mxu0
    %349 = vmatprep.mubr.f32.mxu0 0.0
    %350 = vmatmul.mubr.f32.gmra.mrb[0].mxu0 %v166
    %v351 = vpop.f32.mrb[0].mxu0
    %v352 = vadd.f32 %v126, %v351
    %v353 = vpop.f32.mrb[0].mxu0
    %354 = vmatprep.mubr.f32.mxu0 0.0
    %355 = vmatmul.mubr.f32.gmra.mrb[0].mxu0 %v169
    %v356 = vpop.f32.mrb[0].mxu0
    %v357 = vadd.f32 %v126, %v356
    %v358 = vpop.f32.mrb[0].mxu0
    %359 = vmatprep.mubr.f32.mxu0 0.0
    %360 = vmatmul.mubr.f32.gmra.mrb[0].mxu0 %v172
    %v361 = vpop.f32.mrb[0].mxu0
    %v362 = vadd.f32 %v126, %v361
    %v363 = vpop.f32.mrb[0].mxu0
    %364 = vmatprep.mubr.f32.mxu0 0.0
    %365 = vmatmul.mubr.f32.gmra.mrb[0].mxu0 %v175
    %v366 = vpop.f32.mrb[0].mxu0
    %v367 = vadd.f32 %v126, %v366
    %v368 = vpop.f32.mrb[0].mxu0
    %369 = vmatprep.mubr.f32.mxu0 0.0
    %370 = vmatmul.mubr.f32.gmra.mrb[0].mxu0 %v178
    %v371 = vpop.f32.mrb[0].mxu0
    %v372 = vadd.f32 %v126, %v371
    %v373 = vpop.f32.mrb[0].mxu0
    %374 = vmatprep.mubr.f32.mxu0 0.0
    %375 = vmatmul.mubr.f32.gmra.mrb[0].mxu0 %v181
    %v376 = vpop.f32.mrb[0].mxu0
    %v377 = vadd.f32 %v126, %v376
    %v378 = vpop.f32.mrb[0].mxu0
    %379 = vmatprep.mubr.f32.mxu0 0.0
    %380 = vmatmul.mubr.f32.gmra.mrb[0].mxu0 %v184
    %v381 = vpop.f32.mrb[0].mxu0
    %v382 = vadd.f32 %v126, %v381
    %v383 = vpop.f32.mrb[0].mxu0
    %384 = vmatprep.mubr.f32.mxu0 0.0
    %385 = vmatmul.mubr.f32.gmra.mrb[0].mxu0 %v187
    %v386 = vpop.f32.mrb[0].mxu0
    %v387 = vadd.f32 %v126, %v386
    %v388 = vpop.f32.mrb[0].mxu0
    %389 = vmatprep.mubr.f32.mxu0 0.0
    %390 = vmatmul.mubr.f32.gmra.mrb[0].mxu0 %v190
    %v391 = vpop.f32.mrb[0].mxu0
    %v392 = vadd.f32 %v126, %v391
    %v393 = vpop.f32.mrb[0].mxu0
    %394 = vmatprep.mubr.f32.mxu0 0.0
    %395 = vmatmul.mubr.f32.gmra.mrb[0].mxu0 %v193
    %v396 = vpop.f32.mrb[0].mxu0
    %v397 = vadd.f32 %v126, %v396
    %v398 = vpop.f32.mrb[0].mxu0
    %399 = vmatprep.mubr.f32.mxu0 0.0
    %400 = vmatmul.mubr.f32.gmra.mrb[0].mxu0 %v196
    %v401 = vpop.f32.mrb[0].mxu0
    %v402 = vadd.f32 %v126, %v401
    %v403 = vpop.f32.mrb[0].mxu0
    %404 = vmatprep.mubr.f32.mxu0 0.0
    %405 = vmatmul.mubr.f32.gmra.mrb[0].mxu0 %v199
    %v406 = vpop.f32.mrb[0].mxu0
    %v407 = vadd.f32 %v126, %v406
    %v408 = vpop.f32.mrb[0].mxu0
    %409 = vmatprep.mubr.f32.mxu0 0.0
    %410 = vmatmul.mubr.f32.gmra.mrb[0].mxu0 %v202
    %v411 = vpop.f32.mrb[0].mxu0
    %v412 = vadd.f32 %v126, %v411
    %v413 = vpop.f32.mrb[0].mxu0
    %414 = vmatprep.mubr.f32.mxu0 0.0
    %415 = vmatmul.mubr.f32.gmra.mrb[0].mxu0 %v205
    %v416 = vpop.f32.mrb[0].mxu0
    %v417 = vadd.f32 %v126, %v416
    %v418 = vpop.f32.mrb[0].mxu0
    %419 = vmatprep.mubr.f32.mxu0 0.0
    %420 = vmatmul.mubr.f32.gmra.mrb[0].mxu0 %v208
    %v421 = vpop.f32.mrb[0].mxu0
    %v422 = vadd.f32 %v126, %v421
    %v423 = vpop.f32.mrb[0].mxu0
    %424 = vmatprep.mubr.f32.mxu0 0.0
    %425 = vmatmul.mubr.f32.gmra.mrb[0].mxu0 %v211
    %v426 = vpop.f32.mrb[0].mxu0
    %v427 = vadd.f32 %v126, %v426
    %v428 = vpop.f32.mrb[0].mxu0
    %429 = vmatprep.mubr.f32.mxu0 0.0
    %430 = vmatmul.mubr.f32.gmra.mrb[0].mxu0 %v214
    %v431 = vpop.f32.mrb[0].mxu0
    %v432 = vadd.f32 %v126, %v431
    %v433 = vpop.f32.mrb[0].mxu0
    %434 = vmatprep.mubr.f32.mxu0 0.0
    %435 = vmatmul.mubr.f32.gmra.mrb[0].mxu0 %v217
    %v436 = vpop.f32.mrb[0].mxu0
    %v437 = vadd.f32 %v126, %v436
    %v438 = vpop.f32.mrb[0].mxu0
    %439 = vmatprep.mubr.f32.mxu0 0.0
    %440 = vmatmul.mubr.f32.gmra.mrb[0].mxu0 %v220
    %v441 = vpop.f32.mrb[0].mxu0
    %v442 = vadd.f32 %v126, %v441
    %v443 = vpop.f32.mrb[0].mxu0
    %444 = vmatprep.mubr.f32.mxu0 0.0
    %445 = vmatmul.mubr.f32.gmra.mrb[0].mxu0 %v223
    %v446 = vpop.f32.mrb[0].mxu0
    %v447 = vadd.f32 %v126, %v446
    %v448 = vpop.f32.mrb[0].mxu0
    %449 = vdwg.mxu0
    %v450 = vmax.f32 %v292, 0.0
    %v451 = vmax.f32 %v297, 0.0
    %v452 = vmax.f32 %v302, 0.0
    %v453 = vmax.f32 %v307, 0.0
    %v454 = vmax.f32 %v312, 0.0
    %v455 = vmax.f32 %v317, 0.0
    %v456 = vmax.f32 %v322, 0.0
    %v457 = vmax.f32 %v327, 0.0
    %v458 = vmax.f32 %v332, 0.0
    %v459 = vmax.f32 %v337, 0.0
    %v460 = vmax.f32 %v342, 0.0
    %v461 = vmax.f32 %v347, 0.0
    %v462 = vmax.f32 %v352, 0.0
    %v463 = vmax.f32 %v357, 0.0
    %v464 = vmax.f32 %v362, 0.0
    %v465 = vmax.f32 %v367, 0.0
    %v466 = vmax.f32 %v372, 0.0
    %v467 = vmax.f32 %v377, 0.0
    %v468 = vmax.f32 %v382, 0.0
    %v469 = vmax.f32 %v387, 0.0
    %v470 = vmax.f32 %v392, 0.0
    %v471 = vmax.f32 %v397, 0.0
    %v472 = vmax.f32 %v402, 0.0
    %v473 = vmax.f32 %v407, 0.0
    %v474 = vmax.f32 %v412, 0.0
    %v475 = vmax.f32 %v417, 0.0
    %v476 = vmax.f32 %v422, 0.0
    %v477 = vmax.f32 %v427, 0.0
    %v478 = vmax.f32 %v432, 0.0
    %v479 = vmax.f32 %v437, 0.0
    %v480 = vmax.f32 %v442, 0.0
    %v481 = vmax.f32 %v447, 0.0
    %v482 = vld [vmem:[#allocation7] sm:$0xff]
    %v483 = vld [vmem:[#allocation7 + $0x8] sm:$0xff]
    %v484 = vld [vmem:[#allocation7 + $0x10] sm:$0xff]
    %v485 = vld [vmem:[#allocation7 + $0x18] sm:$0xff]
    %v486 = vld [vmem:[#allocation7 + $0x20] sm:$0xff]
    %v487 = vld [vmem:[#allocation7 + $0x28] sm:$0xff]
    %v488 = vld [vmem:[#allocation7 + $0x30] sm:$0xff]
    %v489 = vld [vmem:[#allocation7 + $0x38] sm:$0xff]
    %v490 = vld [vmem:[#allocation10] sm:$0x1]
    %v492 = vlaneseq
    %v493 = vshrl.u32 %v492, 7
    %v494 = vsub.s32 0, %v493
    %v495 = vrot.slane %v490, %v494
    %vm497 = vcmask 523264
    %v499 = vsel %vm497, %v450, 0
    %v502 = vsel %vm497, %v451, 0
    %v505 = vsel %vm497, %v452, 0
    %v508 = vsel %vm497, %v453, 0
    %v511 = vsel %vm497, %v454, 0
    %v514 = vsel %vm497, %v455, 0
    %v517 = vsel %vm497, %v456, 0
    %v520 = vsel %vm497, %v457, 0
    %v523 = vsel %vm497, %v458, 0
    %v526 = vsel %vm497, %v459, 0
    %v529 = vsel %vm497, %v460, 0
    %v532 = vsel %vm497, %v461, 0
    %v535 = vsel %vm497, %v462, 0
    %v538 = vsel %vm497, %v463, 0
    %v541 = vsel %vm497, %v464, 0
    %v544 = vsel %vm497, %v465, 0
    %v547 = vsel %vm497, %v466, 0
    %v550 = vsel %vm497, %v467, 0
    %v553 = vsel %vm497, %v468, 0
    %v556 = vsel %vm497, %v469, 0
    %v559 = vsel %vm497, %v470, 0
    %v562 = vsel %vm497, %v471, 0
    %v565 = vsel %vm497, %v472, 0
    %v568 = vsel %vm497, %v473, 0
    %v571 = vsel %vm497, %v474, 0
    %v574 = vsel %vm497, %v475, 0
    %v577 = vsel %vm497, %v476, 0
    %v580 = vsel %vm497, %v477, 0
    %v583 = vsel %vm497, %v478, 0
    %v586 = vsel %vm497, %v479, 0
    %v589 = vsel %vm497, %v480, 0
    %v592 = vsel %vm497, %v481, 0
    %594 = vmatprep.subr.mxu0 0.0
    %595 = vmatpush1.msra.mxu0 %v482
    %596 = vmatprep.subr.mxu0 0.0
    %597 = vmatpush1.msra.mxu0 %v483
    %598 = vmatprep.subr.mxu0 0.0
    %599 = vmatpush1.msra.mxu0 %v484
    %600 = vmatprep.subr.mxu0 0.0
    %601 = vmatpush1.msra.mxu0 %v485
    %602 = vmatprep.subr.mxu0 0.0
    %603 = vmatpush1.msra.mxu0 %v486
    %604 = vmatprep.subr.mxu0 0.0
    %605 = vmatpush1.msra.mxu0 %v487
    %606 = vmatprep.subr.mxu0 0.0
    %607 = vmatpush1.msra.mxu0 %v488
    %608 = vmatprep.subr.mxu0 0.0
    %609 = vmatpush1.msra.mxu0 %v489
    %610 = vmatprep.subr.mxu0 0.0
    %611 = vmatpush1.msra.mxu0 0.0
    %612 = vmatprep.subr.mxu0 0.0
    %613 = vmatpush1.msra.mxu0 0.0
    %614 = vmatprep.subr.mxu0 0.0
    %615 = vmatpush1.msra.mxu0 0.0
    %616 = vmatprep.subr.mxu0 0.0
    %617 = vmatpush1.msra.mxu0 0.0
    %618 = vmatprep.subr.mxu0 0.0
    %619 = vmatpush1.msra.mxu0 0.0
    %620 = vmatprep.subr.mxu0 0.0
    %621 = vmatpush1.msra.mxu0 0.0
    %622 = vmatprep.subr.mxu0 0.0
    %623 = vmatpush1.msra.mxu0 0.0
    %624 = vmatprep.subr.mxu0 0.0
    %625 = vmatpush1.msra.mxu0 0.0
    %626 = vmatprep.subr.mxu0 0.0
    %627 = vmatpush1.msra.mxu0 0.0
    %628 = vmatprep.subr.mxu0 0.0
    %629 = vmatpush1.msra.mxu0 0.0
    %630 = vmatprep.subr.mxu0 0.0
    %631 = vmatpush1.msra.mxu0 0.0
    %632 = vmatprep.subr.mxu0 0.0
    %633 = vmatpush1.msra.mxu0 0.0
    %634 = vmatprep.subr.mxu0 0.0
    %635 = vmatpush1.msra.mxu0 0.0
    %636 = vmatprep.subr.mxu0 0.0
    %637 = vmatpush1.msra.mxu0 0.0
    %638 = vmatprep.subr.mxu0 0.0
    %639 = vmatpush1.msra.mxu0 0.0
    %640 = vmatprep.subr.mxu0 0.0
    %641 = vmatpush1.msra.mxu0 0.0
    %642 = vmatprep.subr.mxu0 0.0
    %643 = vmatpush1.msra.mxu0 0.0
    %644 = vmatprep.subr.mxu0 0.0
    %645 = vmatpush1.msra.mxu0 0.0
    %646 = vmatprep.subr.mxu0 0.0
    %647 = vmatpush1.msra.mxu0 0.0
    %648 = vmatprep.subr.mxu0 0.0
    %649 = vmatpush1.msra.mxu0 0.0
    %650 = vmatprep.subr.mxu0 0.0
    %651 = vmatpush1.msra.mxu0 0.0
    %652 = vmatprep.subr.mxu0 0.0
    %653 = vmatpush1.msra.mxu0 0.0
    %654 = vmatprep.subr.mxu0 0.0
    %655 = vmatpush1.msra.mxu0 0.0
    %656 = vmatprep.subr.mxu0 0.0
    %657 = vmatpush1.msra.mxu0 0.0
    %658 = vmatprep.mubr.f32.mxu0 0.0
    %659 = vmatmul.mubr.f32.gmra.mrb[0].mxu0 %v499
    %v660 = vpop.f32.mrb[0].mxu0
    %v661 = vadd.f32 %v495, %v660
    %v662 = vpop.f32.mrb[0].mxu0
    %663 = vmatprep.mubr.f32.mxu0 0.0
    %664 = vmatmul.mubr.f32.gmra.mrb[0].mxu0 %v502
    %v665 = vpop.f32.mrb[0].mxu0
    %v666 = vadd.f32 %v495, %v665
    %v667 = vpop.f32.mrb[0].mxu0
    %668 = vmatprep.mubr.f32.mxu0 0.0
    %669 = vmatmul.mubr.f32.gmra.mrb[0].mxu0 %v505
    %v670 = vpop.f32.mrb[0].mxu0
    %v671 = vadd.f32 %v495, %v670
    %v672 = vpop.f32.mrb[0].mxu0
    %673 = vmatprep.mubr.f32.mxu0 0.0
    %674 = vmatmul.mubr.f32.gmra.mrb[0].mxu0 %v508
    %v675 = vpop.f32.mrb[0].mxu0
    %v676 = vadd.f32 %v495, %v675
    %v677 = vpop.f32.mrb[0].mxu0
    %678 = vmatprep.mubr.f32.mxu0 0.0
    %679 = vmatmul.mubr.f32.gmra.mrb[0].mxu0 %v511
    %v680 = vpop.f32.mrb[0].mxu0
    %v681 = vadd.f32 %v495, %v680
    %v682 = vpop.f32.mrb[0].mxu0
    %683 = vmatprep.mubr.f32.mxu0 0.0
    %684 = vmatmul.mubr.f32.gmra.mrb[0].mxu0 %v514
    %v685 = vpop.f32.mrb[0].mxu0
    %v686 = vadd.f32 %v495, %v685
    %v687 = vpop.f32.mrb[0].mxu0
    %688 = vmatprep.mubr.f32.mxu0 0.0
    %689 = vmatmul.mubr.f32.gmra.mrb[0].mxu0 %v517
    %v690 = vpop.f32.mrb[0].mxu0
    %v691 = vadd.f32 %v495, %v690
    %v692 = vpop.f32.mrb[0].mxu0
    %693 = vmatprep.mubr.f32.mxu0 0.0
    %694 = vmatmul.mubr.f32.gmra.mrb[0].mxu0 %v520
    %v695 = vpop.f32.mrb[0].mxu0
    %v696 = vadd.f32 %v495, %v695
    %v697 = vpop.f32.mrb[0].mxu0
    %698 = vmatprep.mubr.f32.mxu0 0.0
    %699 = vmatmul.mubr.f32.gmra.mrb[0].mxu0 %v523
    %v700 = vpop.f32.mrb[0].mxu0
    %v701 = vadd.f32 %v495, %v700
    %v702 = vpop.f32.mrb[0].mxu0
    %703 = vmatprep.mubr.f32.mxu0 0.0
    %704 = vmatmul.mubr.f32.gmra.mrb[0].mxu0 %v526
    %v705 = vpop.f32.mrb[0].mxu0
    %v706 = vadd.f32 %v495, %v705
    %v707 = vpop.f32.mrb[0].mxu0
    %708 = vmatprep.mubr.f32.mxu0 0.0
    %709 = vmatmul.mubr.f32.gmra.mrb[0].mxu0 %v529
    %v710 = vpop.f32.mrb[0].mxu0
    %v711 = vadd.f32 %v495, %v710
    %v712 = vpop.f32.mrb[0].mxu0
    %713 = vmatprep.mubr.f32.mxu0 0.0
    %714 = vmatmul.mubr.f32.gmra.mrb[0].mxu0 %v532
    %v715 = vpop.f32.mrb[0].mxu0
    %v716 = vadd.f32 %v495, %v715
    %v717 = vpop.f32.mrb[0].mxu0
    %718 = vmatprep.mubr.f32.mxu0 0.0
    %719 = vmatmul.mubr.f32.gmra.mrb[0].mxu0 %v535
    %v720 = vpop.f32.mrb[0].mxu0
    %v721 = vadd.f32 %v495, %v720
    %v722 = vpop.f32.mrb[0].mxu0
    %723 = vmatprep.mubr.f32.mxu0 0.0
    %724 = vmatmul.mubr.f32.gmra.mrb[0].mxu0 %v538
    %v725 = vpop.f32.mrb[0].mxu0
    %v726 = vadd.f32 %v495, %v725
    %v727 = vpop.f32.mrb[0].mxu0
    %728 = vmatprep.mubr.f32.mxu0 0.0
    %729 = vmatmul.mubr.f32.gmra.mrb[0].mxu0 %v541
    %v730 = vpop.f32.mrb[0].mxu0
    %v731 = vadd.f32 %v495, %v730
    %v732 = vpop.f32.mrb[0].mxu0
    %733 = vmatprep.mubr.f32.mxu0 0.0
    %734 = vmatmul.mubr.f32.gmra.mrb[0].mxu0 %v544
    %v735 = vpop.f32.mrb[0].mxu0
    %v736 = vadd.f32 %v495, %v735
    %v737 = vpop.f32.mrb[0].mxu0
    %738 = vmatprep.mubr.f32.mxu0 0.0
    %739 = vmatmul.mubr.f32.gmra.mrb[0].mxu0 %v547
    %v740 = vpop.f32.mrb[0].mxu0
    %v741 = vadd.f32 %v495, %v740
    %v742 = vpop.f32.mrb[0].mxu0
    %743 = vmatprep.mubr.f32.mxu0 0.0
    %744 = vmatmul.mubr.f32.gmra.mrb[0].mxu0 %v550
    %v745 = vpop.f32.mrb[0].mxu0
    %v746 = vadd.f32 %v495, %v745
    %v747 = vpop.f32.mrb[0].mxu0
    %748 = vmatprep.mubr.f32.mxu0 0.0
    %749 = vmatmul.mubr.f32.gmra.mrb[0].mxu0 %v553
    %v750 = vpop.f32.mrb[0].mxu0
    %v751 = vadd.f32 %v495, %v750
    %v752 = vpop.f32.mrb[0].mxu0
    %753 = vmatprep.mubr.f32.mxu0 0.0
    %754 = vmatmul.mubr.f32.gmra.mrb[0].mxu0 %v556
    %v755 = vpop.f32.mrb[0].mxu0
    %v756 = vadd.f32 %v495, %v755
    %v757 = vpop.f32.mrb[0].mxu0
    %758 = vmatprep.mubr.f32.mxu0 0.0
    %759 = vmatmul.mubr.f32.gmra.mrb[0].mxu0 %v559
    %v760 = vpop.f32.mrb[0].mxu0
    %v761 = vadd.f32 %v495, %v760
    %v762 = vpop.f32.mrb[0].mxu0
    %763 = vmatprep.mubr.f32.mxu0 0.0
    %764 = vmatmul.mubr.f32.gmra.mrb[0].mxu0 %v562
    %v765 = vpop.f32.mrb[0].mxu0
    %v766 = vadd.f32 %v495, %v765
    %v767 = vpop.f32.mrb[0].mxu0
    %768 = vmatprep.mubr.f32.mxu0 0.0
    %769 = vmatmul.mubr.f32.gmra.mrb[0].mxu0 %v565
    %v770 = vpop.f32.mrb[0].mxu0
    %v771 = vadd.f32 %v495, %v770
    %v772 = vpop.f32.mrb[0].mxu0
    %773 = vmatprep.mubr.f32.mxu0 0.0
    %774 = vmatmul.mubr.f32.gmra.mrb[0].mxu0 %v568
    %v775 = vpop.f32.mrb[0].mxu0
    %v776 = vadd.f32 %v495, %v775
    %v777 = vpop.f32.mrb[0].mxu0
    %778 = vmatprep.mubr.f32.mxu0 0.0
    %779 = vmatmul.mubr.f32.gmra.mrb[0].mxu0 %v571
    %v780 = vpop.f32.mrb[0].mxu0
    %v781 = vadd.f32 %v495, %v780
    %v782 = vpop.f32.mrb[0].mxu0
    %783 = vmatprep.mubr.f32.mxu0 0.0
    %784 = vmatmul.mubr.f32.gmra.mrb[0].mxu0 %v574
    %v785 = vpop.f32.mrb[0].mxu0
    %v786 = vadd.f32 %v495, %v785
    %v787 = vpop.f32.mrb[0].mxu0
    %788 = vmatprep.mubr.f32.mxu0 0.0
    %789 = vmatmul.mubr.f32.gmra.mrb[0].mxu0 %v577
    %v790 = vpop.f32.mrb[0].mxu0
    %v791 = vadd.f32 %v495, %v790
    %v792 = vpop.f32.mrb[0].mxu0
    %793 = vmatprep.mubr.f32.mxu0 0.0
    %794 = vmatmul.mubr.f32.gmra.mrb[0].mxu0 %v580
    %v795 = vpop.f32.mrb[0].mxu0
    %v796 = vadd.f32 %v495, %v795
    %v797 = vpop.f32.mrb[0].mxu0
    %798 = vmatprep.mubr.f32.mxu0 0.0
    %799 = vmatmul.mubr.f32.gmra.mrb[0].mxu0 %v583
    %v800 = vpop.f32.mrb[0].mxu0
    %v801 = vadd.f32 %v495, %v800
    %v802 = vpop.f32.mrb[0].mxu0
    %803 = vmatprep.mubr.f32.mxu0 0.0
    %804 = vmatmul.mubr.f32.gmra.mrb[0].mxu0 %v586
    %v805 = vpop.f32.mrb[0].mxu0
    %v806 = vadd.f32 %v495, %v805
    %v807 = vpop.f32.mrb[0].mxu0
    %808 = vmatprep.mubr.f32.mxu0 0.0
    %809 = vmatmul.mubr.f32.gmra.mrb[0].mxu0 %v589
    %v810 = vpop.f32.mrb[0].mxu0
    %v811 = vadd.f32 %v495, %v810
    %v812 = vpop.f32.mrb[0].mxu0
    %813 = vmatprep.mubr.f32.mxu0 0.0
    %814 = vmatmul.mubr.f32.gmra.mrb[0].mxu0 %v592
    %v815 = vpop.f32.mrb[0].mxu0
    %v816 = vadd.f32 %v495, %v815
    %v817 = vpop.f32.mrb[0].mxu0
    %818 = vdwg.mxu0
    %v819 = vmax.f32 %v661, 0.0
    %v820 = vmax.f32 %v666, 0.0
    %v821 = vmax.f32 %v671, 0.0
    %v822 = vmax.f32 %v676, 0.0
    %v823 = vmax.f32 %v681, 0.0
    %v824 = vmax.f32 %v686, 0.0
    %v825 = vmax.f32 %v691, 0.0
    %v826 = vmax.f32 %v696, 0.0
    %v827 = vmax.f32 %v701, 0.0
    %v828 = vmax.f32 %v706, 0.0
    %v829 = vmax.f32 %v711, 0.0
    %v830 = vmax.f32 %v716, 0.0
    %v831 = vmax.f32 %v721, 0.0
    %v832 = vmax.f32 %v726, 0.0
    %v833 = vmax.f32 %v731, 0.0
    %v834 = vmax.f32 %v736, 0.0
    %v835 = vmax.f32 %v741, 0.0
    %v836 = vmax.f32 %v746, 0.0
    %v837 = vmax.f32 %v751, 0.0
    %v838 = vmax.f32 %v756, 0.0
    %v839 = vmax.f32 %v761, 0.0
    %v840 = vmax.f32 %v766, 0.0
    %v841 = vmax.f32 %v771, 0.0
    %v842 = vmax.f32 %v776, 0.0
    %v843 = vmax.f32 %v781, 0.0
    %v844 = vmax.f32 %v786, 0.0
    %v845 = vmax.f32 %v791, 0.0
    %v846 = vmax.f32 %v796, 0.0
    %v847 = vmax.f32 %v801, 0.0
    %v848 = vmax.f32 %v806, 0.0
    %v849 = vmax.f32 %v811, 0.0
    %v850 = vmax.f32 %v816, 0.0
    %v851 = vsel %vm497, %v819, -inf
    %v852 = vsel %vm497, %v820, -inf
    %v853 = vmax.f32 %v851, %v852
    %v854 = vrot.slane %v853, 4
    %v855 = vmax.f32 %v853, %v854
    %v856 = vrot.slane %v855, 2
    %v857 = vmax.f32 %v855, %v856
    %v858 = vrot.slane %v857, 1
    %v859 = vmax.f32 %v857, %v858
    %v860 = vsel %vm497, %v821, -inf
    %v861 = vsel %vm497, %v822, -inf
    %v862 = vmax.f32 %v860, %v861
    %v863 = vrot.slane %v862, 4
    %v864 = vmax.f32 %v862, %v863
    %v865 = vrot.slane %v864, 2
    %v866 = vmax.f32 %v864, %v865
    %v867 = vrot.slane %v866, 1
    %v868 = vmax.f32 %v866, %v867
    %v869 = vsel %vm497, %v823, -inf
    %v870 = vsel %vm497, %v824, -inf
    %v871 = vmax.f32 %v869, %v870
    %v872 = vrot.slane %v871, 4
    %v873 = vmax.f32 %v871, %v872
    %v874 = vrot.slane %v873, 2
    %v875 = vmax.f32 %v873, %v874
    %v876 = vrot.slane %v875, 1
    %v877 = vmax.f32 %v875, %v876
    %v878 = vsel %vm497, %v825, -inf
    %v879 = vsel %vm497, %v826, -inf
    %v880 = vmax.f32 %v878, %v879
    %v881 = vrot.slane %v880, 4
    %v882 = vmax.f32 %v880, %v881
    %v883 = vrot.slane %v882, 2
    %v884 = vmax.f32 %v882, %v883
    %v885 = vrot.slane %v884, 1
    %v886 = vmax.f32 %v884, %v885
    %v887 = vsel %vm497, %v827, -inf
    %v888 = vsel %vm497, %v828, -inf
    %v889 = vmax.f32 %v887, %v888
    %v890 = vrot.slane %v889, 4
    %v891 = vmax.f32 %v889, %v890
    %v892 = vrot.slane %v891, 2
    %v893 = vmax.f32 %v891, %v892
    %v894 = vrot.slane %v893, 1
    %v895 = vmax.f32 %v893, %v894
    %v896 = vsel %vm497, %v829, -inf
    %v897 = vsel %vm497, %v830, -inf
    %v898 = vmax.f32 %v896, %v897
    %v899 = vrot.slane %v898, 4
    %v900 = vmax.f32 %v898, %v899
    %v901 = vrot.slane %v900, 2
    %v902 = vmax.f32 %v900, %v901
    %v903 = vrot.slane %v902, 1
    %v904 = vmax.f32 %v902, %v903
    %v905 = vsel %vm497, %v831, -inf
    %v906 = vsel %vm497, %v832, -inf
    %v907 = vmax.f32 %v905, %v906
    %v908 = vrot.slane %v907, 4
    %v909 = vmax.f32 %v907, %v908
    %v910 = vrot.slane %v909, 2
    %v911 = vmax.f32 %v909, %v910
    %v912 = vrot.slane %v911, 1
    %v913 = vmax.f32 %v911, %v912
    %v914 = vsel %vm497, %v833, -inf
    %v915 = vsel %vm497, %v834, -inf
    %v916 = vmax.f32 %v914, %v915
    %v917 = vrot.slane %v916, 4
    %v918 = vmax.f32 %v916, %v917
    %v919 = vrot.slane %v918, 2
    %v920 = vmax.f32 %v918, %v919
    %v921 = vrot.slane %v920, 1
    %v922 = vmax.f32 %v920, %v921
    %v923 = vsel %vm497, %v835, -inf
    %v924 = vsel %vm497, %v836, -inf
    %v925 = vmax.f32 %v923, %v924
    %v926 = vrot.slane %v925, 4
    %v927 = vmax.f32 %v925, %v926
    %v928 = vrot.slane %v927, 2
    %v929 = vmax.f32 %v927, %v928
    %v930 = vrot.slane %v929, 1
    %v931 = vmax.f32 %v929, %v930
    %v932 = vsel %vm497, %v837, -inf
    %v933 = vsel %vm497, %v838, -inf
    %v934 = vmax.f32 %v932, %v933
    %v935 = vrot.slane %v934, 4
    %v936 = vmax.f32 %v934, %v935
    %v937 = vrot.slane %v936, 2
    %v938 = vmax.f32 %v936, %v937
    %v939 = vrot.slane %v938, 1
    %v940 = vmax.f32 %v938, %v939
    %v941 = vsel %vm497, %v839, -inf
    %v942 = vsel %vm497, %v840, -inf
    %v943 = vmax.f32 %v941, %v942
    %v944 = vrot.slane %v943, 4
    %v945 = vmax.f32 %v943, %v944
    %v946 = vrot.slane %v945, 2
    %v947 = vmax.f32 %v945, %v946
    %v948 = vrot.slane %v947, 1
    %v949 = vmax.f32 %v947, %v948
    %v950 = vsel %vm497, %v841, -inf
    %v951 = vsel %vm497, %v842, -inf
    %v952 = vmax.f32 %v950, %v951
    %v953 = vrot.slane %v952, 4
    %v954 = vmax.f32 %v952, %v953
    %v955 = vrot.slane %v954, 2
    %v956 = vmax.f32 %v954, %v955
    %v957 = vrot.slane %v956, 1
    %v958 = vmax.f32 %v956, %v957
    %v959 = vsel %vm497, %v843, -inf
    %v960 = vsel %vm497, %v844, -inf
    %v961 = vmax.f32 %v959, %v960
    %v962 = vrot.slane %v961, 4
    %v963 = vmax.f32 %v961, %v962
    %v964 = vrot.slane %v963, 2
    %v965 = vmax.f32 %v963, %v964
    %v966 = vrot.slane %v965, 1
    %v967 = vmax.f32 %v965, %v966
    %v968 = vsel %vm497, %v845, -inf
    %v969 = vsel %vm497, %v846, -inf
    %v970 = vmax.f32 %v968, %v969
    %v971 = vrot.slane %v970, 4
    %v972 = vmax.f32 %v970, %v971
    %v973 = vrot.slane %v972, 2
    %v974 = vmax.f32 %v972, %v973
    %v975 = vrot.slane %v974, 1
    %v976 = vmax.f32 %v974, %v975
    %v977 = vsel %vm497, %v847, -inf
    %v978 = vsel %vm497, %v848, -inf
    %v979 = vmax.f32 %v977, %v978
    %v980 = vrot.slane %v979, 4
    %v981 = vmax.f32 %v979, %v980
    %v982 = vrot.slane %v981, 2
    %v983 = vmax.f32 %v981, %v982
    %v984 = vrot.slane %v983, 1
    %v985 = vmax.f32 %v983, %v984
    %v986 = vsel %vm497, %v849, -inf
    %v987 = vsel %vm497, %v850, -inf
    %v988 = vmax.f32 %v986, %v987
    %v989 = vrot.slane %v988, 4
    %v990 = vmax.f32 %v988, %v989
    %v991 = vrot.slane %v990, 2
    %v992 = vmax.f32 %v990, %v991
    %v993 = vrot.slane %v992, 1
    %v994 = vmax.f32 %v992, %v993
    %vm1011 = vcmask 1041409
    %v1012 = vsel %vm1011, %v868, %v859
    %vm1013 = vcmask 1042434
    %v1014 = vsel %vm1013, %v877, %v1012
    %vm1015 = vcmask 1043459
    %v1016 = vsel %vm1015, %v886, %v1014
    %vm1017 = vcmask 1044484
    %v1018 = vsel %vm1017, %v895, %v1016
    %vm1019 = vcmask 1045509
    %v1020 = vsel %vm1019, %v904, %v1018
    %vm1021 = vcmask 1046534
    %v1022 = vsel %vm1021, %v913, %v1020
    %vm1023 = vcmask 1047559
    %v1024 = vsel %vm1023, %v922, %v1022
    %v1025 = vsel %vm1011, %v940, %v931
    %v1026 = vsel %vm1013, %v949, %v1025
    %v1027 = vsel %vm1015, %v958, %v1026
    %v1028 = vsel %vm1017, %v967, %v1027
    %v1029 = vsel %vm1019, %v976, %v1028
    %v1030 = vsel %vm1021, %v985, %v1029
    %v1031 = vsel %vm1023, %v994, %v1030
    %1034 = vst.msk [vmem:[#allocation11] sm:$0xff] %vm497, %v1024
    %1035 = vst.msk [vmem:[#allocation11 + $0x8] sm:$0xff] %vm497, %v1031
    // Predicated region
    $region42: #{tpu_custom_call.1} parent=1 // pred_check
      _
    $region43: #{tpu_custom_call.1} parent=1 // pred_check_branch
      %1037 = sbr.rel (0) target = $region45
    $region44: #{tpu_custom_call.1} parent=1 // pred_region
      %s1039 = ssub.s32 256, 256
      %1040 = vsyncadd [#allocation4], %s1039
      %s1041 = sshll.u32 [#allocation11], 4
      %s1042 = int_to_ptr.vmem [resolvable:$true] %s1041
      %1047 = dma.vmem_to_hbm [thread:$0]  %s1042, 256, %s5, [#allocation4], 128, 128, 8
    $region45: #{tpu_custom_call.1} parent=1 // pred_fallthru
      _
    // Predicated region
    $region46: #{tpu_custom_call.1} parent=1 // pred_check
      _
    $region47: #{tpu_custom_call.1} parent=1 // pred_check_branch
      %1049 = sbr.rel (0) target = $region49
    $region48: #{tpu_custom_call.1} parent=1 // pred_region
      %1050 = dma.done [#allocation4], 256
    $region49: #{tpu_custom_call.1} parent=1 // pred_fallthru
      _
    %1051 = vsyncpa [#allocation3], 1
    %1052 = vsyncpa [#allocation6], 1
    %1053 = vsyncpa [#allocation9], 1
    %1054 = vsyncpa [#allocation4], 1

</llo_original>
